<compile_context>
chip_gen: v7x
topology: tpu7x:2x2x1
jax: 0.10.0
libtpu: 0.0.40
codegen_flags: <defaults>
</compile_context>

<pallas_src>
import jax
import jax.numpy as jnp
from jax.experimental import pallas as pl
from jax.experimental.pallas import tpu as pltpu


def generate_embedding_matrix(max_len: int, d: int, dtype=jnp.float32) -> jnp.ndarray:
    """Standard sinusoidal positional-embedding matrix, shape (max_len, d)."""
    pos = jnp.arange(max_len, dtype=jnp.float32)[:, None]              # (max_len, 1)
    i = jnp.arange(d, dtype=jnp.float32)[None, :]                      # (1, d)
    # div term uses the even index (2*(i//2)) as in the canonical formulation
    angle_rates = jnp.exp(-(2.0 * jnp.floor(i / 2.0) / d) * jnp.log(10000.0))
    angles = pos * angle_rates                                         # (max_len, d)
    # even columns -> sin, odd columns -> cos
    is_even = (jnp.arange(d) % 2) == 0
    emb = jnp.where(is_even[None, :], jnp.sin(angles), jnp.cos(angles))
    return emb.astype(dtype)


def _add_emb_kernel(x_ref, e_ref, o_ref):
    # x_ref/o_ref: (rows_tile, cols); e_ref: (1, cols) -> sublane broadcast add.
    o_ref[...] = x_ref[...] + e_ref[...]


def _choose_rows_tile(rows: int, cols: int, itemsize: int,
                      target_bytes: int = 2 * 1024 * 1024) -> int:
    """Pick a sublane-aligned row tile giving ~target_bytes per block."""
    # bf16 packs 16 rows / vreg, int8 packs 32; keep the sublane dim aligned
    # (a full-extent block is always legal, whatever its size).
    sub = max(8, 32 // max(1, itemsize))
    if rows <= sub:
        return rows
    t = max(1, target_bytes // max(1, cols * itemsize))
    if t >= rows:
        return rows
    return max(sub, (t // sub) * sub)


def temporal_embedding(X: jnp.ndarray, max_len: int, lookup_index=None,
                       dtype=None) -> jnp.ndarray:
    """JAX/Pallas equivalent of Temporal_embedding.forward (dropout p=0.0)."""
    if dtype is not None:
        X = X.astype(dtype)            # mirrors X.type(self.dtype) when requested
    b, T, N, d = X.shape
    out_dtype = X.dtype

    # Build E once in f32 (accurate sin/cos), cast once to the compute dtype.
    Etp = generate_embedding_matrix(max_len, d, dtype=jnp.float32)      # (max_len, d)
    if lookup_index is not None:
        E = Etp[jnp.asarray(lookup_index)]                              # (N, d)
    else:
        E = Etp[:N, :]                                                  # (N, d)
    cols = N * d
    rows = b * T
    E_row = E.astype(out_dtype).reshape(1, cols)                        # lane-dense row

    X2 = X.reshape(rows, cols)                                          # lane-dense slab

    itemsize = jnp.dtype(out_dtype).itemsize
    rows_tile = _choose_rows_tile(rows, cols, itemsize)
    grid = (pl.cdiv(rows, rows_tile),)

    out2 = pl.pallas_call(
        _add_emb_kernel,
        out_shape=jax.ShapeDtypeStruct((rows, cols), out_dtype),
        grid=grid,
        in_specs=[
            pl.BlockSpec((rows_tile, cols), lambda i: (i, 0)),
            pl.BlockSpec((1, cols), lambda i: (0, 0)),   # constant index: no re-DMA
        ],
        out_specs=pl.BlockSpec((rows_tile, cols), lambda i: (i, 0)),
        input_output_aliases={0: 0},                     # out aliases X (pure update)
        compiler_params=pltpu.CompilerParams(
            dimension_semantics=("parallel",)),
    )(X2, E_row)

    return out2.reshape(b, T, N, d)  # dropout(p=0.0) is identity


if __name__ == "__main__":
    key = jax.random.PRNGKey(0)
    b, T, N, d = 2, 8, 16, 32
    max_len = 16  # N <= max_len (Etp[:N] path)

    X = jax.random.normal(key, (b, T, N, d), dtype=jnp.float32)

    out = temporal_embedding(X, max_len=max_len, lookup_index=None)
    out = jax.block_until_ready(out)

    # reference check in plain JAX (f32)
    E_ref = generate_embedding_matrix(max_len, d)[:N, :]
    ref = X + E_ref[None, None, :, :]
    assert out.shape == (b, T, N, d)
    assert out.dtype == jnp.float32
    assert jnp.allclose(out, ref, atol=1e-6, rtol=1e-6)

    # native-dtype path (no forced upcast): bf16 in -> bf16 out
    X_bf = X.astype(jnp.bfloat16)
    out_bf = jax.block_until_ready(temporal_embedding(X_bf, max_len=max_len))
    assert out_bf.dtype == jnp.bfloat16
    assert jnp.allclose(out_bf.astype(jnp.float32), ref, atol=2e-2, rtol=2e-2)

    print("KERNEL_OK")
</pallas_src>

<mosaic_0001>
module attributes {stable_mosaic.version = 11 : i64} {
  func.func @_add_emb_kernel(%arg0: i32, %arg1: memref<16x512xf32, #tpu.memory_space<vmem>>, %arg2: memref<1x512xf32, #tpu.memory_space<vmem>>, %arg3: memref<16x512xf32, #tpu.memory_space<vmem>>) attributes {dimension_semantics = [#tpu.dimension_semantics<parallel>], iteration_bounds = array<i64: 1>, scalar_prefetch = 0 : i64, scratch_operands = 0 : i64, tpu.core_type = #tpu.core_type<tc>, window_params = [{transform_indices = @transform_0, window_bounds = array<i64: 16, 512>}, {pipeline_mode = #tpu.pipeline_mode<synchronous>, transform_indices = @transform_1, window_bounds = array<i64: 1, 512>}, {transform_indices = @transform_2, window_bounds = array<i64: 16, 512>}]} {
    %c0 = arith.constant 0 : index
    %c0_0 = arith.constant 0 : index
    %0 = vector.load %arg1[%c0, %c0_0] : memref<16x512xf32, #tpu.memory_space<vmem>>, vector<16x512xf32>
    %c0_1 = arith.constant 0 : index
    %c0_2 = arith.constant 0 : index
    %1 = vector.load %arg2[%c0_1, %c0_2] : memref<1x512xf32, #tpu.memory_space<vmem>>, vector<1x512xf32>
    %2 = vector.broadcast %1 : vector<1x512xf32> to vector<16x512xf32>
    %3 = arith.addf %0, %2 : vector<16x512xf32>
    %c0_3 = arith.constant 0 : index
    %c0_4 = arith.constant 0 : index
    %4 = vector.load %arg3[%c0_3, %c0_4] : memref<16x512xf32, #tpu.memory_space<vmem>>, vector<16x512xf32>
    tpu.vector_store %arg3[%c0_3, %c0_4], %3 {strides = array<i32>} : memref<16x512xf32, #tpu.memory_space<vmem>>, vector<16x512xf32>,
    return
  }
  func.func @transform_0(%arg0: i32) -> (i32, i32) {
    %c0_i32 = arith.constant 0 : i32
    %c0_i32_0 = arith.constant 0 : i32
    return %arg0, %c0_i32 : i32, i32
  }
  func.func @transform_1(%arg0: i32) -> (i32, i32) {
    %c0_i32 = arith.constant 0 : i32
    %c0_i32_0 = arith.constant 0 : i32
    %c0_i32_1 = arith.constant 0 : i32
    return %c0_i32, %c0_i32_0 : i32, i32
  }
  func.func @transform_2(%arg0: i32) -> (i32, i32) {
    %c0_i32 = arith.constant 0 : i32
    %c0_i32_0 = arith.constant 0 : i32
    return %arg0, %c0_i32 : i32, i32
  }
}

</mosaic_0001>

<llo_original>
// kernel: tpu_custom_call.1
$region0: #{tpu_custom_call.1}
  #allocation0 [shape = 'u32[]', space=smem, size = 0x4, offset = 0x4, fixed_abs, tag = 'smem constant byte address 0x4 - core index']
  #allocation1 [shape = 'u32[144,128]{1,0:T(1,128)}', space=vmem, size = 0x12000, scoped, tag = 'internal scratch']
  %s0 = inlined_call_operand.hbm [shape: f32[16,512], index: 0, kind: input, shape index: {}, may-alias: {0,2}]
  %s1 = inlined_call_operand.vmem [shape: f32[1,512], index: 1, kind: input, shape index: {}]
  %s2 = inlined_call_operand.hbm [shape: f32[16,512], index: 2, kind: output, shape index: {}, may-alias: {0,2}]
  %s3 = sld [smem:[#allocation0]]
  $region22: #{tpu_custom_call.1} parent=0
    _
  %s5 = ssub.s32 1, %s3
  %s6 = scalar_select 0, %s5, %s3
  $region1: #{tpu_custom_call.1} parent=0
    #allocation2 [shape = 'u8[32768]{0}', space=vmem, size = 0x8000, scoped, tag = 'input window, operand 0, single buffered']
    #allocation3 [shape = 's32[1]{0}', space=sflag, size = 0x4, scoped, tag = 'scoped memory for tpu_custom_call.1']
    #allocation4 [shape = 's32[1]{0}', space=sflag, size = 0x4, scoped, tag = 'scoped memory for tpu_custom_call.1']
    #allocation5 [shape = 'u8[32768]{0}', space=vmem, size = 0x8000, scoped, tag = 'output window, operand 0, single buffered']
    %7 = vsyncpa [#allocation3], 0
    %8 = vsyncpa [#allocation4], 0
    // Predicated region
    $region2: #{tpu_custom_call.1} parent=1 // pred_check
      _
    $region3: #{tpu_custom_call.1} parent=1 // pred_check_branch
      %10 = sbr.rel (0) target = $region5
    $region4: #{tpu_custom_call.1} parent=1 // pred_region
      %s12 = ssub.s32 1024, 1024
      %13 = vsyncadd [#allocation3], %s12
      %s14 = sshll.u32 [#allocation2], 4
      %s15 = int_to_ptr.vmem [resolvable:$true] %s14
      %20 = dma.hbm_to_vmem [thread:$0]  %s0, 1024, %s15, [#allocation3], 512, 512, 32
    $region5: #{tpu_custom_call.1} parent=1 // pred_fallthru
      _
    // Predicated region
    $region6: #{tpu_custom_call.1} parent=1 // pred_check
      _
    $region7: #{tpu_custom_call.1} parent=1 // pred_check_branch
      %22 = sbr.rel (0) target = $region9
    $region8: #{tpu_custom_call.1} parent=1 // pred_region
      _
    $region9: #{tpu_custom_call.1} parent=1 // pred_fallthru
      _
    // Predicated region
    $region10: #{tpu_custom_call.1} parent=1 // pred_check
      _
    $region11: #{tpu_custom_call.1} parent=1 // pred_check_branch
      %24 = sbr.rel (0) target = $region13
    $region12: #{tpu_custom_call.1} parent=1 // pred_region
      %25 = dma.done [#allocation3], 1024
    $region13: #{tpu_custom_call.1} parent=1 // pred_fallthru
      _
    %v26 = vld [vmem:[#allocation2] sm:$0xff]
    %v27 = vld [vmem:[#allocation2 + $0x8] sm:$0xff]
    %v28 = vld [vmem:[#allocation2 + $0x10] sm:$0xff]
    %v29 = vld [vmem:[#allocation2 + $0x18] sm:$0xff]
    %v30 = vld [vmem:[#allocation2 + $0x20] sm:$0xff]
    %v31 = vld [vmem:[#allocation2 + $0x28] sm:$0xff]
    %v32 = vld [vmem:[#allocation2 + $0x30] sm:$0xff]
    %v33 = vld [vmem:[#allocation2 + $0x38] sm:$0xff]
    %v34 = vld [vmem:[%s1] sm:$0xf]
    %v36 = vlaneseq
    %v37 = vshrl.u32 %v36, 7
    %v38 = vsub.s32 0, %v37
    %v39 = vrot.slane %v34, %v38
    %v40 = vlaneseq
    %v41 = vshrl.u32 %v40, 7
    %v42 = vsub.s32 1, %v41
    %v43 = vrot.slane %v34, %v42
    %v44 = vlaneseq
    %v45 = vshrl.u32 %v44, 7
    %v46 = vsub.s32 2, %v45
    %v47 = vrot.slane %v34, %v46
    %v48 = vlaneseq
    %v49 = vshrl.u32 %v48, 7
    %v50 = vsub.s32 3, %v49
    %v51 = vrot.slane %v34, %v50
    %v56 = vadd.f32 %v26, %v39
    %v57 = vadd.f32 %v27, %v43
    %v58 = vadd.f32 %v28, %v47
    %v59 = vadd.f32 %v29, %v51
    %v60 = vadd.f32 %v30, %v39
    %v61 = vadd.f32 %v31, %v43
    %v62 = vadd.f32 %v32, %v47
    %v63 = vadd.f32 %v33, %v51
    %64 = vst [vmem:[#allocation5] sm:$0xff] %v56
    %65 = vst [vmem:[#allocation5 + $0x8] sm:$0xff] %v57
    %66 = vst [vmem:[#allocation5 + $0x10] sm:$0xff] %v58
    %67 = vst [vmem:[#allocation5 + $0x18] sm:$0xff] %v59
    %68 = vst [vmem:[#allocation5 + $0x20] sm:$0xff] %v60
    %69 = vst [vmem:[#allocation5 + $0x28] sm:$0xff] %v61
    %70 = vst [vmem:[#allocation5 + $0x30] sm:$0xff] %v62
    %71 = vst [vmem:[#allocation5 + $0x38] sm:$0xff] %v63
    // Predicated region
    $region14: #{tpu_custom_call.1} parent=1 // pred_check
      _
    $region15: #{tpu_custom_call.1} parent=1 // pred_check_branch
      %73 = sbr.rel (0) target = $region17
    $region16: #{tpu_custom_call.1} parent=1 // pred_region
      %s75 = ssub.s32 1024, 1024
      %76 = vsyncadd [#allocation4], %s75
      %s77 = sshll.u32 [#allocation5], 4
      %s78 = int_to_ptr.vmem [resolvable:$true] %s77
      %83 = dma.vmem_to_hbm [thread:$0]  %s78, 1024, %s2, [#allocation4], 512, 512, 32
    $region17: #{tpu_custom_call.1} parent=1 // pred_fallthru
      _
    // Predicated region
    $region18: #{tpu_custom_call.1} parent=1 // pred_check
      _
    $region19: #{tpu_custom_call.1} parent=1 // pred_check_branch
      %85 = sbr.rel (0) target = $region21
    $region20: #{tpu_custom_call.1} parent=1 // pred_region
      %86 = dma.done [#allocation4], 1024
    $region21: #{tpu_custom_call.1} parent=1 // pred_fallthru
      _
    %87 = vsyncpa [#allocation3], 1
    %88 = vsyncpa [#allocation4], 1

</llo_original>
